<compile_context>
chip_gen: v6e
topology: v6e:2x2x1
jax: 0.10.0
libtpu: 0.0.40
codegen_flags: <defaults>
</compile_context>

<pallas_src>
import math

import jax
import jax.numpy as jnp
from jax.experimental import pallas as pl
from jax.experimental.pallas import tpu as pltpu


# ---------------------------------------------------------------------------
# Kernel: one elementwise add per tile.  The pe tile is broadcast over every
# batch row held in the block.
# ---------------------------------------------------------------------------
def pos_enc_kernel(x_ref, pe_ref, o_ref):
    # x_ref: (Bblk, tile_s, Dp)   pe_ref: (tile_s, Dp)   o_ref: (Bblk, tile_s, Dp)
    o_ref[...] = (x_ref[...] + pe_ref[...][None, :, :]).astype(o_ref.dtype)


# ---------------------------------------------------------------------------
# Sinusoidal table (matches the torch buffer; safe for odd d_model too).
# ---------------------------------------------------------------------------
def make_positional_encoding_table(max_seq_len, d_model, dtype=jnp.float32):
    position = jnp.arange(max_seq_len, dtype=jnp.float32)[:, None]
    div_mult = jnp.exp(
        jnp.arange(0, d_model, 2, dtype=jnp.float32) * (-math.log(10000.0) / d_model)
    )
    pos_scaled = position * div_mult                       # (max_seq_len, ceil(D/2))
    pe = jnp.zeros((max_seq_len, d_model), jnp.float32)
    pe = pe.at[:, 0::2].set(jnp.sin(pos_scaled))
    pe = pe.at[:, 1::2].set(jnp.cos(pos_scaled[:, : d_model // 2]))  # odd-D safe
    return pe.astype(dtype)


def _lane_pack_factor(d_model, itemsize):
    # Smallest p such that (p * d_model) % 128 == 0 (p == 1 if already aligned).
    p = 128 // math.gcd(d_model, 128)
    # Guard against pathological widths where packing would make even a minimal
    # 8-row block enormous; fall back to masked lanes there.
    if p * d_model * itemsize > (1 << 20):
        return 1
    return p


def pack_pos_enc(pe_table, dtype):
    """Pre-cast + lane-pack the (max_seq_len, D) table to (max_seq_len/p, D*p)."""
    max_len, d_model = pe_table.shape
    itemsize = jnp.dtype(dtype).itemsize
    p = _lane_pack_factor(d_model, itemsize)
    pad = (-max_len) % p
    pe = pe_table.astype(dtype)
    if pad:
        pe = jnp.pad(pe, ((0, pad), (0, 0)))
    return pe.reshape((max_len + pad) // p, d_model * p), p


def _select_seq_tile(Sp, row_bytes, sublane, target_tile_bytes, want_multi_step):
    """Always a sublane-multiple tile; boundary blocks are clipped by pl.cdiv."""
    sp_ceil = -(-Sp // sublane) * sublane
    rows = max(sublane, target_tile_bytes // max(row_bytes, 1))
    tile_s = max(sublane, (rows // sublane) * sublane)
    tile_s = min(tile_s, sp_ceil)
    if want_multi_step and tile_s >= Sp and Sp >= 2 * sublane:
        # Split so v7x megacore has >= 2 parallel grid steps (both TC DMA engines).
        tile_s = max(sublane, ((sp_ceil // 2) // sublane) * sublane)
    return tile_s


# ---------------------------------------------------------------------------
# Wrapper
# ---------------------------------------------------------------------------
def positional_encoding_packed(x, pe_packed, p, *, target_tile_bytes=4 << 20,
                               batch_fold_max=8):
    """x: (B, S, D); pe_packed: (ceil(max_seq_len/p), D*p) lane-packed table."""
    B, S, D = x.shape
    Dp = D * p
    assert pe_packed.shape[-1] == Dp, "pe_packed does not match pack factor / d_model"
    if pe_packed.dtype != x.dtype:            # slow path; normally pre-cast once
        pe_packed = pe_packed.astype(x.dtype)

    # Lane packing: fold p positions into the lane dim; pad S up to a multiple
    # of p if needed (few extra rows, sliced off at the end).
    s_pad = (-S) % p
    Sp = (S + s_pad) // p
    assert Sp <= pe_packed.shape[0], "seq_len exceeds max_seq_len of the pe table"
    x2 = jnp.pad(x, ((0, 0), (0, s_pad), (0, 0))) if s_pad else x
    x2 = x2.reshape(B, Sp, Dp)

    itemsize = jnp.dtype(x.dtype).itemsize
    sublane = 8 if itemsize >= 4 else (16 if itemsize == 2 else 32)

    # Small batches: fold the whole batch into one block -> B x fewer grid steps
    # and one pe DMA shared across the batch.
    fold_batch = B <= batch_fold_max
    row_bytes = (B if fold_batch else 1) * Dp * itemsize
    tile_s = _select_seq_tile(Sp, row_bytes, sublane, target_tile_bytes,
                              want_multi_step=fold_batch)
    n_seq_tiles = pl.cdiv(Sp, tile_s)

    if fold_batch:
        grid = (n_seq_tiles,)
        in_specs = [
            pl.BlockSpec((B, tile_s, Dp), lambda j: (0, j, 0)),      # x rows
            pl.BlockSpec((tile_s, Dp), lambda j: (j, 0)),            # pos enc
        ]
        out_specs = pl.BlockSpec((B, tile_s, Dp), lambda j: (0, j, 0))
        semantics = ("parallel",)
    else:
        # Batch innermost -> pe block is grid-invariant across batch steps.
        grid = (n_seq_tiles, B)
        in_specs = [
            pl.BlockSpec((1, tile_s, Dp), lambda j, b: (b, j, 0)),
            pl.BlockSpec((tile_s, Dp), lambda j, b: (j, 0)),
        ]
        out_specs = pl.BlockSpec((1, tile_s, Dp), lambda j, b: (b, j, 0))
        semantics = ("parallel", "parallel")

    out = pl.pallas_call(
        pos_enc_kernel,
        out_shape=jax.ShapeDtypeStruct((B, Sp, Dp), x.dtype),
        grid_spec=pltpu.PrefetchScalarGridSpec(
            num_scalar_prefetch=0,
            grid=grid,
            in_specs=in_specs,
            out_specs=out_specs,
        ),
        compiler_params=pltpu.CompilerParams(
            dimension_semantics=semantics,
            # ~4 MiB tiles, double-buffered x/out + pe: well under this ceiling
            # on every generation (explicitly raised past v5e's 16 MiB default,
            # still safe inside v7x's 64 MiB physical VMEM).
            vmem_limit_bytes=48 << 20,
        ),
    )(x2, pe_packed)

    out = out.reshape(B, S + s_pad, D)
    return out[:, :S, :] if s_pad else out


class PositionalEncoding:
    """JAX/Pallas equivalent of the torch PositionalEncoding module (eval mode)."""

    def __init__(self, d_model, max_seq_len, p_dropout, dtype=jnp.float32):
        # TODO(synk): training-mode dropout omitted (eval-mode identity).
        del p_dropout
        table = make_positional_encoding_table(max_seq_len, d_model, dtype)
        # Pre-cast + pre-pack once so the per-call path touches the table only
        # inside the kernel.
        self.pe_packed, self.pack = pack_pos_enc(table, dtype)
        self._fn = jax.jit(positional_encoding_packed, static_argnums=(2,))

    def __call__(self, x):
        return self._fn(x, self.pe_packed, self.pack)


def reference(x, pe_table):
    S = x.shape[1]
    return x + pe_table[:S][None, :, :].astype(x.dtype)


if __name__ == "__main__":
    key = jax.random.PRNGKey(0)

    # Primary small config implied by the module: batch=2, seq=8, d_model=32.
    B, S, D = 2, 8, 32
    MAX_SEQ_LEN = 64
    P_DROPOUT = 0.1             # eval mode -> identity

    module = PositionalEncoding(D, MAX_SEQ_LEN, P_DROPOUT)
    x = jax.random.normal(key, (B, S, D), dtype=jnp.float32)
    out = jax.block_until_ready(module(x))

    ref = reference(x, make_positional_encoding_table(MAX_SEQ_LEN, D))
    assert out.shape == (B, S, D)
    assert jnp.allclose(out, ref, atol=1e-6, rtol=1e-6), "mismatch vs reference"

    # Extra coverage (still small): (a) non-batch-folded path (B > 8) with S not
    # a multiple of the lane-pack factor, (b) multi-seq-tile path with a clipped
    # boundary block.
    for (b2, s2, d2) in [(12, 10, 48), (3, 40, 64)]:
        k2 = jax.random.fold_in(key, b2 * 1000 + s2)
        x2 = jax.random.normal(k2, (b2, s2, d2), dtype=jnp.float32)
        mod2 = PositionalEncoding(d2, MAX_SEQ_LEN, P_DROPOUT)
        o2 = jax.block_until_ready(mod2(x2))
        r2 = reference(x2, make_positional_encoding_table(MAX_SEQ_LEN, d2))
        assert o2.shape == x2.shape
        assert jnp.allclose(o2, r2, atol=1e-6, rtol=1e-6), "mismatch vs reference"

    print("KERNEL_OK")
</pallas_src>

<mosaic_0001>
module attributes {stable_mosaic.version = 11 : i64} {
  func.func @pos_enc_kernel(%arg0: i32, %arg1: memref<2x8x128xf32, #tpu.memory_space<vmem>>, %arg2: memref<8x128xf32, #tpu.memory_space<vmem>>, %arg3: memref<2x8x128xf32, #tpu.memory_space<vmem>>) attributes {dimension_semantics = [#tpu.dimension_semantics<parallel>], iteration_bounds = array<i64: 1>, scalar_prefetch = 0 : i64, scratch_operands = 0 : i64, tpu.core_type = #tpu.core_type<tc>, window_params = [{transform_indices = @transform_0, window_bounds = array<i64: 2, 8, 128>}, {transform_indices = @transform_1, window_bounds = array<i64: 8, 128>}, {transform_indices = @transform_2, window_bounds = array<i64: 2, 8, 128>}]} {
    %c0 = arith.constant 0 : index
    %c0_0 = arith.constant 0 : index
    %c0_1 = arith.constant 0 : index
    %0 = vector.load %arg1[%c0, %c0_0, %c0_1] : memref<2x8x128xf32, #tpu.memory_space<vmem>>, vector<2x8x128xf32>
    %c0_2 = arith.constant 0 : index
    %c0_3 = arith.constant 0 : index
    %1 = vector.load %arg2[%c0_2, %c0_3] : memref<8x128xf32, #tpu.memory_space<vmem>>, vector<8x128xf32>
    %2 = vector.shape_cast %1 : vector<8x128xf32> to vector<1x8x128xf32>
    %3 = vector.broadcast %2 : vector<1x8x128xf32> to vector<2x8x128xf32>
    %4 = arith.addf %0, %3 : vector<2x8x128xf32>
    %c0_4 = arith.constant 0 : index
    %c0_5 = arith.constant 0 : index
    %c0_6 = arith.constant 0 : index
    %5 = vector.load %arg3[%c0_4, %c0_5, %c0_6] : memref<2x8x128xf32, #tpu.memory_space<vmem>>, vector<2x8x128xf32>
    tpu.vector_store %arg3[%c0_4, %c0_5, %c0_6], %4 {strides = array<i32>} : memref<2x8x128xf32, #tpu.memory_space<vmem>>, vector<2x8x128xf32>,
    return
  }
  func.func @transform_0(%arg0: i32) -> (i32, i32, i32) {
    %c0_i32 = arith.constant 0 : i32
    %c0_i32_0 = arith.constant 0 : i32
    %c0_i32_1 = arith.constant 0 : i32
    return %c0_i32, %arg0, %c0_i32_0 : i32, i32, i32
  }
  func.func @transform_1(%arg0: i32) -> (i32, i32) {
    %c0_i32 = arith.constant 0 : i32
    %c0_i32_0 = arith.constant 0 : i32
    return %arg0, %c0_i32 : i32, i32
  }
  func.func @transform_2(%arg0: i32) -> (i32, i32, i32) {
    %c0_i32 = arith.constant 0 : i32
    %c0_i32_0 = arith.constant 0 : i32
    %c0_i32_1 = arith.constant 0 : i32
    return %c0_i32, %arg0, %c0_i32_0 : i32, i32, i32
  }
}

</mosaic_0001>

<llo_original>
// kernel: positional_encoding_packed.1
$region0: #{positional_encoding_packed.1}
  #allocation0 [shape = 'u32[]', space=smem, size = 0x4, offset = 0x4, fixed_abs, tag = 'smem constant byte address 0x4 - core index']
  #allocation1 [shape = 'u32[144,128]{1,0:T(1,128)}', space=vmem, size = 0x12000, scoped, tag = 'internal scratch']
  %s0 = inlined_call_operand.vmem [shape: f32[2,2,128], index: 0, kind: input, shape index: {}]
  %s1 = inlined_call_operand.vmem [shape: f32[16,128], index: 1, kind: input, shape index: {}]
  %s2 = inlined_call_operand.vmem [shape: f32[2,2,128], index: 2, kind: output, shape index: {}]
  %s3 = sld [smem:[#allocation0]]
  $region82: #{positional_encoding_packed.1} parent=0
    _
  %s5 = ssub.s32 1, %s3
  %s6 = scalar_select 0, %s5, %s3
  $region1: #{positional_encoding_packed.1} parent=0
    #allocation2 [shape = 'u8[8192]{0}', space=vmem, size = 0x2000, scoped, tag = 'input window, operand 0, single buffered']
    #allocation3 [shape = 'u8[8192]{0}', space=vmem, size = 0x2000, scoped, tag = 'output window, operand 0, single buffered']
    // Predicated region
    $region2: #{positional_encoding_packed.1} parent=1 // pred_check
      _
    $region3: #{positional_encoding_packed.1} parent=1 // pred_check_branch
      %8 = sbr.rel (0) target = $region5
    $region4: #{positional_encoding_packed.1} parent=1 // pred_region
      // Predicated region
      $region6: #{positional_encoding_packed.1} parent=4 // pred_check
        _
      $region7: #{positional_encoding_packed.1} parent=4 // pred_check_branch
        %10 = sbr.rel (0) target = $region9
      $region8: #{positional_encoding_packed.1} parent=4 // pred_region
        // Predicated region
        $region10: #{positional_encoding_packed.1} parent=8 // pred_check
          _
        $region11: #{positional_encoding_packed.1} parent=8 // pred_check_branch
          %12 = sbr.rel target = $region13
        $region12: #{positional_encoding_packed.1} parent=8 // pred_region
          // Predicated region
          $region25: #{positional_encoding_packed.1} parent=12 // pred_check
            _
          $region26: #{positional_encoding_packed.1} parent=12 // pred_check_branch
            %30 = sbr.rel (0) target = $region28
          $region27: #{positional_encoding_packed.1} parent=12 // pred_region
            %s32 = ssub.s32 4, 1
            loop: start=0, step=1, limit=1
            $region29: #{positional_encoding_packed.1} parent=27 // loop_pre_header
              _
            $region30: #{positional_encoding_packed.1} parent=27 // loop_header
              %s34 = sphi 0, %s38
              %p35 = scmp.ge.s32.totalorder %s34, 1
              %s39 = sphi %s0, %s0
              %s40 = sphi [#allocation2], [#allocation2]
            $region31: #{positional_encoding_packed.1} parent=27 // loop_header_branch
              %37 = sbr.rel (%p35) target = $region35
            $region32: #{positional_encoding_packed.1} parent=27 // loop_body
              %v41 = vld [vmem:[%s39] sm:%s32]
              %42 = vst [vmem:[%s40] sm:%s32] %v41
              %v43 = vld [vmem:[%s39 + $0x2] sm:%s32]
              %44 = vst [vmem:[%s40 + $0x8] sm:%s32] %v43
            $region33: #{positional_encoding_packed.1} parent=27 // loop_footer
              %s38 = sadd.s32 1, %s34
            $region34: #{positional_encoding_packed.1} parent=27 // loop_footer_branch
              %33 = sbr.rel target = $region30
            $region35: #{positional_encoding_packed.1} parent=27 // loop_exit
              _
          $region28: #{positional_encoding_packed.1} parent=12 // pred_fallthru
            _
        $region13: #{positional_encoding_packed.1} parent=8 // pred_fallthru
          _
        // Predicated region
        $region14: #{positional_encoding_packed.1} parent=8 // pred_check
          _
        $region15: #{positional_encoding_packed.1} parent=8 // pred_check_branch
          %14 = sbr.rel (0) target = $region17
        $region16: #{positional_encoding_packed.1} parent=8 // pred_region
          %s16 = ssub.s32 4, 1
          loop: start=0, step=1, limit=1
          $region18: #{positional_encoding_packed.1} parent=16 // loop_pre_header
            _
          $region19: #{positional_encoding_packed.1} parent=16 // loop_header
            %s18 = sphi 0, %s22
            %p19 = scmp.ge.s32.totalorder %s18, 1
            %s23 = sphi %s0, %s0
            %s24 = sphi [#allocation2], [#allocation2]
          $region20: #{positional_encoding_packed.1} parent=16 // loop_header_branch
            %21 = sbr.rel (%p19) target = $region24
          $region21: #{positional_encoding_packed.1} parent=16 // loop_body
            %v25 = vld [vmem:[%s23] sm:%s16]
            %26 = vst [vmem:[%s24] sm:%s16] %v25
            %v27 = vld [vmem:[%s23 + $0x2] sm:%s16]
            %28 = vst [vmem:[%s24 + $0x8] sm:%s16] %v27
          $region22: #{positional_encoding_packed.1} parent=16 // loop_footer
            %s22 = sadd.s32 1, %s18
          $region23: #{positional_encoding_packed.1} parent=16 // loop_footer_branch
            %17 = sbr.rel target = $region19
          $region24: #{positional_encoding_packed.1} parent=16 // loop_exit
            _
        $region17: #{positional_encoding_packed.1} parent=8 // pred_fallthru
          _
      $region9: #{positional_encoding_packed.1} parent=4 // pred_fallthru
        _
      %45 = vnop
    $region5: #{positional_encoding_packed.1} parent=1 // pred_fallthru
      _
    // Predicated region
    $region36: #{positional_encoding_packed.1} parent=1 // pred_check
      _
    $region37: #{positional_encoding_packed.1} parent=1 // pred_check_branch
      %47 = sbr.rel (0) target = $region39
    $region38: #{positional_encoding_packed.1} parent=1 // pred_region
      _
    $region39: #{positional_encoding_packed.1} parent=1 // pred_fallthru
      _
    // Predicated region
    $region40: #{positional_encoding_packed.1} parent=1 // pred_check
      _
    $region41: #{positional_encoding_packed.1} parent=1 // pred_check_branch
      %49 = sbr.rel (0) target = $region43
    $region42: #{positional_encoding_packed.1} parent=1 // pred_region
      _
    $region43: #{positional_encoding_packed.1} parent=1 // pred_fallthru
      _
    %v50 = vld [vmem:[#allocation2] sm:$0xff]
    %v51 = vld [vmem:[#allocation2 + $0x8] sm:$0xff]
    %v52 = vld [vmem:[%s1] sm:$0xff]
    %v53 = vadd.f32 %v50, %v52
    %v54 = vadd.f32 %v51, %v52
    %55 = vst [vmem:[#allocation3] sm:$0xff] %v53
    %56 = vst [vmem:[#allocation3 + $0x8] sm:$0xff] %v54
    // Predicated region
    $region44: #{positional_encoding_packed.1} parent=1 // pred_check
      _
    $region45: #{positional_encoding_packed.1} parent=1 // pred_check_branch
      %58 = sbr.rel (0) target = $region47
    $region46: #{positional_encoding_packed.1} parent=1 // pred_region
      // Predicated region
      $region48: #{positional_encoding_packed.1} parent=46 // pred_check
        _
      $region49: #{positional_encoding_packed.1} parent=46 // pred_check_branch
        %60 = sbr.rel (0) target = $region51
      $region50: #{positional_encoding_packed.1} parent=46 // pred_region
        // Predicated region
        $region52: #{positional_encoding_packed.1} parent=50 // pred_check
          _
        $region53: #{positional_encoding_packed.1} parent=50 // pred_check_branch
          %62 = sbr.rel target = $region55
        $region54: #{positional_encoding_packed.1} parent=50 // pred_region
          // Predicated region
          $region67: #{positional_encoding_packed.1} parent=54 // pred_check
            _
          $region68: #{positional_encoding_packed.1} parent=54 // pred_check_branch
            %80 = sbr.rel (0) target = $region70
          $region69: #{positional_encoding_packed.1} parent=54 // pred_region
            %s82 = ssub.s32 4, 1
            loop: start=0, step=1, limit=1
            $region71: #{positional_encoding_packed.1} parent=69 // loop_pre_header
              _
            $region72: #{positional_encoding_packed.1} parent=69 // loop_header
              %s84 = sphi 0, %s88
              %p85 = scmp.ge.s32.totalorder %s84, 1
              %s89 = sphi [#allocation3], [#allocation3]
              %s90 = sphi %s2, %s2
            $region73: #{positional_encoding_packed.1} parent=69 // loop_header_branch
              %87 = sbr.rel (%p85) target = $region77
            $region74: #{positional_encoding_packed.1} parent=69 // loop_body
              %v91 = vld [vmem:[%s89] sm:%s82]
              %92 = vst [vmem:[%s90] sm:%s82] %v91
              %v93 = vld [vmem:[%s89 + $0x8] sm:%s82]
              %94 = vst [vmem:[%s90 + $0x2] sm:%s82] %v93
            $region75: #{positional_encoding_packed.1} parent=69 // loop_footer
              %s88 = sadd.s32 1, %s84
            $region76: #{positional_encoding_packed.1} parent=69 // loop_footer_branch
              %83 = sbr.rel target = $region72
            $region77: #{positional_encoding_packed.1} parent=69 // loop_exit
              _
          $region70: #{positional_encoding_packed.1} parent=54 // pred_fallthru
            _
        $region55: #{positional_encoding_packed.1} parent=50 // pred_fallthru
          _
        // Predicated region
        $region56: #{positional_encoding_packed.1} parent=50 // pred_check
          _
        $region57: #{positional_encoding_packed.1} parent=50 // pred_check_branch
          %64 = sbr.rel (0) target = $region59
        $region58: #{positional_encoding_packed.1} parent=50 // pred_region
          %s66 = ssub.s32 4, 1
          loop: start=0, step=1, limit=1
          $region60: #{positional_encoding_packed.1} parent=58 // loop_pre_header
            _
          $region61: #{positional_encoding_packed.1} parent=58 // loop_header
            %s68 = sphi 0, %s72
            %p69 = scmp.ge.s32.totalorder %s68, 1
            %s73 = sphi [#allocation3], [#allocation3]
            %s74 = sphi %s2, %s2
          $region62: #{positional_encoding_packed.1} parent=58 // loop_header_branch
            %71 = sbr.rel (%p69) target = $region66
          $region63: #{positional_encoding_packed.1} parent=58 // loop_body
            %v75 = vld [vmem:[%s73] sm:%s66]
            %76 = vst [vmem:[%s74] sm:%s66] %v75
            %v77 = vld [vmem:[%s73 + $0x8] sm:%s66]
            %78 = vst [vmem:[%s74 + $0x2] sm:%s66] %v77
          $region64: #{positional_encoding_packed.1} parent=58 // loop_footer
            %s72 = sadd.s32 1, %s68
          $region65: #{positional_encoding_packed.1} parent=58 // loop_footer_branch
            %67 = sbr.rel target = $region61
          $region66: #{positional_encoding_packed.1} parent=58 // loop_exit
            _
        $region59: #{positional_encoding_packed.1} parent=50 // pred_fallthru
          _
      $region51: #{positional_encoding_packed.1} parent=46 // pred_fallthru
        _
      %95 = vnop
    $region47: #{positional_encoding_packed.1} parent=1 // pred_fallthru
      _
    // Predicated region
    $region78: #{positional_encoding_packed.1} parent=1 // pred_check
      _
    $region79: #{positional_encoding_packed.1} parent=1 // pred_check_branch
      %97 = sbr.rel (0) target = $region81
    $region80: #{positional_encoding_packed.1} parent=1 // pred_region
      _
    $region81: #{positional_encoding_packed.1} parent=1 // pred_fallthru
      _

</llo_original>
